<compile_context>
chip_gen: v6e
topology: v6e:2x2x1
jax: 0.10.0
libtpu: 0.0.40
codegen_flags: <defaults>
</compile_context>

<pallas_src>
import functools

import jax
import jax.numpy as jnp
from jax import lax
from jax.experimental import pallas as pl
from jax.experimental.pallas import tpu as pltpu


def net_kernel(x_ref, w1_ref, b1_ref, w2_ref, b2_ref, o_ref):
    # x_ref : (TB, D_in) VMEM   natural row-major batch tile (streamed)
    # w1_ref: (H, D_in)  VMEM   fc1 weight in torch (out, in) layout (resident)
    # b1_ref: (H, 1)     VMEM
    # w2_ref: (H, 1)     VMEM   fc2 weight as a column
    # b2_ref: (1, 1)     SMEM   scalar
    # o_ref : (1, TB)    VMEM   lane-dense output tile
    #
    # fc1: contract both operands on their last (D_in) axis so the result is
    # (H, TB) with batch on the LANE axis (lane-dense intermediates and
    # unmasked lane-dense output stores) without any wrapper-side HBM
    # transpose of x; Mosaic handles the transposed MXU operand in-VMEM.
    hidden = lax.dot_general(
        w1_ref[...], x_ref[...],
        dimension_numbers=(((1,), (1,)), ((), ())),
        preferred_element_type=jnp.float32,
    ) + b1_ref[...]                                              # (H, TB)

    # sigmoid via the single-EUP tanh identity: sigmoid(z) = 0.5*tanh(z/2)+0.5.
    # Halves the EUP transcendental pushes vs exp + reciprocal and is accurate
    # to f32 precision.
    sig = 0.5 * jnp.tanh(0.5 * hidden) + 0.5                     # (H, TB)

    # fc2: a (1,H)@(H,TB) matmul with N=1 / K=30 would waste the MXU; do it as
    # a VPU multiply + cross-sublane (XLU) reduction instead.
    logits = jnp.sum(sig * w2_ref[...], axis=0, keepdims=True) + b2_ref[0, 0]

    # Final sigmoid, same single-EUP tanh form.
    o_ref[...] = (0.5 * jnp.tanh(0.5 * logits) + 0.5).astype(o_ref.dtype)


def _pick_block_b(batch):
    # Lane-dense tile (multiple of 128).  Cap at 8192: with x streamed in its
    # natural (B, 16) layout the 16-wide lane dim pads to 128 in VMEM (8x
    # footprint), so an 8192-row tile is 4 MiB per buffer / 8 MiB
    # double-buffered -- comfortably inside every generation's default scoped
    # VMEM (16/32/32 MiB on v5e/v6e/v7x) -- while each grid step still moves
    # 512 KB of real HBM data and amortizes the ~0.35 us per-step overhead.
    padded = ((batch + 127) // 128) * 128
    return min(8192, padded)


@functools.partial(jax.jit, static_argnames=("block_b",))
def net_forward(x, w1, b1, w2, b2, *, block_b=None):
    """x: (B, D_in) float32; params in torch layout:
       w1 (H, D_in), b1 (H,), w2 (1, H), b2 (1,).  Returns (B, 1) float32."""
    B, D_in = x.shape
    H, _ = w1.shape
    if block_b is None:
        block_b = _pick_block_b(B)

    # Pad the batch up to a multiple of the tile (at most block_b-1 rows of
    # zero work); padded rows are sliced away after the kernel.
    padded_B = pl.cdiv(B, block_b) * block_b
    if padded_B != B:
        x = jnp.pad(x, ((0, padded_B - B), (0, 0)))

    # Layout plumbing only (tiny param arrays, no extra HBM pass over x).
    b1_col = b1.reshape(H, 1)       # broadcasts over lanes in-kernel
    w2_col = w2.reshape(H, 1)
    b2_s = b2.reshape(1, 1)         # SMEM scalar

    grid = (padded_B // block_b,)
    out_t = pl.pallas_call(
        net_kernel,
        out_shape=jax.ShapeDtypeStruct((1, padded_B), jnp.float32),
        grid_spec=pltpu.PrefetchScalarGridSpec(
            num_scalar_prefetch=0,
            grid=grid,
            in_specs=[
                pl.BlockSpec((block_b, D_in), lambda i: (i, 0)),    # x tile (streamed)
                pl.BlockSpec((H, D_in), lambda i: (0, 0)),          # W1 (resident, ~2 KB)
                pl.BlockSpec((H, 1), lambda i: (0, 0)),             # b1
                pl.BlockSpec((H, 1), lambda i: (0, 0)),             # W2 column
                pl.BlockSpec(memory_space=pltpu.MemorySpace.SMEM),  # b2 scalar
            ],
            out_specs=pl.BlockSpec((1, block_b), lambda i: (0, i)), # lane-dense
        ),
        compiler_params=pltpu.CompilerParams(
            # batch axis is independent -> shards across v7x's 2 TensorCores
            dimension_semantics=("parallel",),
        ),
    )(x, w1, b1_col, w2_col, b2_s)

    # (1, padded_B) -> (padded_B, 1) is a free reshape (no transpose copy);
    # slice off any padded rows.
    return out_t.reshape(padded_B, 1)[:B]


def init_params(key, input_size, hidden_size):
    """torch.nn.Linear default init (U(-1/sqrt(fan_in), +)), kept in torch
    (out_features, in_features) layout."""
    k1, k2, k3, k4 = jax.random.split(key, 4)
    bound1 = 1.0 / jnp.sqrt(jnp.float32(input_size))
    bound2 = 1.0 / jnp.sqrt(jnp.float32(hidden_size))
    w1 = jax.random.uniform(k1, (hidden_size, input_size), jnp.float32, -bound1, bound1)
    b1 = jax.random.uniform(k2, (hidden_size,), jnp.float32, -bound1, bound1)
    w2 = jax.random.uniform(k3, (1, hidden_size), jnp.float32, -bound2, bound2)
    b2 = jax.random.uniform(k4, (1,), jnp.float32, -bound2, bound2)
    return w1, b1, w2, b2


def net_forward_ref(x, w1, b1, w2, b2):
    h = x @ w1.T + b1
    s = jax.nn.sigmoid(h)
    o = s @ w2.T + b2
    return jax.nn.sigmoid(o)


if __name__ == "__main__":
    hidden_size = 30
    input_size = 16
    batch = 256   # single lane-dense tile; small batches are launch-bound anyway

    key = jax.random.PRNGKey(0)
    kx, kp = jax.random.split(key)

    # mimic `training_input.float() / 1000`
    x = jax.random.uniform(kx, (batch, input_size), jnp.float32, 0.0, 1000.0) / 1000.0

    w1, b1, w2, b2 = init_params(kp, input_size, hidden_size)

    out = jax.block_until_ready(net_forward(x, w1, b1, w2, b2))
    ref = net_forward_ref(x, w1, b1, w2, b2)

    assert out.shape == (batch, 1)
    # tanh-form sigmoid is exact to f32 precision -> tight tolerance restored.
    assert jnp.allclose(out, ref, atol=1e-5, rtol=1e-5)

    print("KERNEL_OK")
</pallas_src>

<mosaic_0001>
module attributes {stable_mosaic.version = 11 : i64} {
  func.func @net_kernel(%arg0: i32, %arg1: memref<256x16xf32, #tpu.memory_space<vmem>>, %arg2: memref<30x16xf32, #tpu.memory_space<vmem>>, %arg3: memref<30x1xf32, #tpu.memory_space<vmem>>, %arg4: memref<30x1xf32, #tpu.memory_space<vmem>>, %arg5: memref<1x1xf32, #tpu.memory_space<smem>>, %arg6: memref<1x256xf32, #tpu.memory_space<vmem>>) attributes {dimension_semantics = [#tpu.dimension_semantics<parallel>], iteration_bounds = array<i64: 1>, scalar_prefetch = 0 : i64, scratch_operands = 0 : i64, tpu.core_type = #tpu.core_type<tc>, window_params = [{transform_indices = @transform_0, window_bounds = array<i64: 256, 16>}, {pipeline_mode = #tpu.pipeline_mode<synchronous>, transform_indices = @transform_1, window_bounds = array<i64: 30, 16>}, {pipeline_mode = #tpu.pipeline_mode<synchronous>, transform_indices = @transform_2, window_bounds = array<i64: 30, 1>}, {pipeline_mode = #tpu.pipeline_mode<synchronous>, transform_indices = @transform_3, window_bounds = array<i64: 30, 1>}, {transform_indices = @transform_4, window_bounds = array<i64: 1, 1>}, {transform_indices = @transform_5, window_bounds = array<i64: 1, 256>}]} {
    %c0 = arith.constant 0 : index
    %c0_0 = arith.constant 0 : index
    %0 = vector.load %arg2[%c0, %c0_0] : memref<30x16xf32, #tpu.memory_space<vmem>>, vector<30x16xf32>
    %c0_1 = arith.constant 0 : index
    %c0_2 = arith.constant 0 : index
    %1 = vector.load %arg1[%c0_1, %c0_2] : memref<256x16xf32, #tpu.memory_space<vmem>>, vector<256x16xf32>
    %cst = arith.constant dense<0.000000e+00> : vector<30x256xf32>
    %2 = tpu.matmul %0, %1, %cst {dimension_numbers = #tpu.dot_dimension_numbers<[1], [1], [0], [0], [0, 0, 1, 0], [], []>} : vector<30x16xf32>, vector<256x16xf32>, vector<30x256xf32> -> vector<30x256xf32>
    %c0_3 = arith.constant 0 : index
    %c0_4 = arith.constant 0 : index
    %3 = vector.load %arg3[%c0_3, %c0_4] : memref<30x1xf32, #tpu.memory_space<vmem>>, vector<30x1xf32>
    %4 = vector.broadcast %3 : vector<30x1xf32> to vector<30x256xf32>
    %5 = arith.addf %2, %4 : vector<30x256xf32>
    %cst_5 = arith.constant 5.000000e-01 : f32
    %6 = vector.broadcast %cst_5 : f32 to vector<30x256xf32>
    %7 = arith.mulf %6, %5 : vector<30x256xf32>
    %8 = math.tanh %7 : vector<30x256xf32>
    %cst_6 = arith.constant 5.000000e-01 : f32
    %9 = vector.broadcast %cst_6 : f32 to vector<30x256xf32>
    %10 = arith.mulf %9, %8 : vector<30x256xf32>
    %cst_7 = arith.constant 5.000000e-01 : f32
    %11 = vector.broadcast %cst_7 : f32 to vector<30x256xf32>
    %12 = arith.addf %10, %11 : vector<30x256xf32>
    %c0_8 = arith.constant 0 : index
    %c0_9 = arith.constant 0 : index
    %13 = vector.load %arg4[%c0_8, %c0_9] : memref<30x1xf32, #tpu.memory_space<vmem>>, vector<30x1xf32>
    %14 = vector.broadcast %13 : vector<30x1xf32> to vector<30x256xf32>
    %15 = arith.mulf %12, %14 : vector<30x256xf32>
    %cst_10 = arith.constant dense<0.000000e+00> : vector<256xf32>
    %16 = vector.multi_reduction <add>, %15, %cst_10 [0] : vector<30x256xf32> to vector<256xf32>
    %17 = vector.shape_cast %16 : vector<256xf32> to vector<1x256xf32>
    %c0_11 = arith.constant 0 : index
    %c0_12 = arith.constant 0 : index
    %18 = memref.load %arg5[%c0_11, %c0_12] : memref<1x1xf32, #tpu.memory_space<smem>>
    %19 = vector.broadcast %18 : f32 to vector<1x256xf32>
    %20 = arith.addf %17, %19 : vector<1x256xf32>
    %cst_13 = arith.constant 5.000000e-01 : f32
    %21 = vector.broadcast %cst_13 : f32 to vector<1x256xf32>
    %22 = arith.mulf %21, %20 : vector<1x256xf32>
    %23 = math.tanh %22 : vector<1x256xf32>
    %cst_14 = arith.constant 5.000000e-01 : f32
    %24 = vector.broadcast %cst_14 : f32 to vector<1x256xf32>
    %25 = arith.mulf %24, %23 : vector<1x256xf32>
    %cst_15 = arith.constant 5.000000e-01 : f32
    %26 = vector.broadcast %cst_15 : f32 to vector<1x256xf32>
    %27 = arith.addf %25, %26 : vector<1x256xf32>
    %c0_16 = arith.constant 0 : index
    %c0_17 = arith.constant 0 : index
    %28 = vector.load %arg6[%c0_16, %c0_17] : memref<1x256xf32, #tpu.memory_space<vmem>>, vector<1x256xf32>
    tpu.vector_store %arg6[%c0_16, %c0_17], %27 {strides = array<i32>} : memref<1x256xf32, #tpu.memory_space<vmem>>, vector<1x256xf32>,
    return
  }
  func.func @transform_0(%arg0: i32) -> (i32, i32) {
    %c0_i32 = arith.constant 0 : i32
    %c0_i32_0 = arith.constant 0 : i32
    return %arg0, %c0_i32 : i32, i32
  }
  func.func @transform_1(%arg0: i32) -> (i32, i32) {
    %c0_i32 = arith.constant 0 : i32
    %c0_i32_0 = arith.constant 0 : i32
    %c0_i32_1 = arith.constant 0 : i32
    return %c0_i32, %c0_i32_0 : i32, i32
  }
  func.func @transform_2(%arg0: i32) -> (i32, i32) {
    %c0_i32 = arith.constant 0 : i32
    %c0_i32_0 = arith.constant 0 : i32
    %c0_i32_1 = arith.constant 0 : i32
    return %c0_i32, %c0_i32_0 : i32, i32
  }
  func.func @transform_3(%arg0: i32) -> (i32, i32) {
    %c0_i32 = arith.constant 0 : i32
    %c0_i32_0 = arith.constant 0 : i32
    %c0_i32_1 = arith.constant 0 : i32
    return %c0_i32, %c0_i32_0 : i32, i32
  }
  func.func @transform_4(%arg0: i32) -> (i32, i32) {
    %c0_i32 = arith.constant 0 : i32
    %c0_i32_0 = arith.constant 0 : i32
    %c0_i32_1 = arith.constant 0 : i32
    return %c0_i32, %c0_i32_0 : i32, i32
  }
  func.func @transform_5(%arg0: i32) -> (i32, i32) {
    %c0_i32 = arith.constant 0 : i32
    %c0_i32_0 = arith.constant 0 : i32
    return %c0_i32, %arg0 : i32, i32
  }
}

</mosaic_0001>

<llo_original>
// kernel: net_forward.1
$region0: #{net_forward.1}
  #allocation0 [shape = 'u32[]', space=smem, size = 0x4, offset = 0x4, fixed_abs, tag = 'smem constant byte address 0x4 - core index']
  #allocation1 [shape = 'u32[144,128]{1,0:T(1,128)}', space=vmem, size = 0x12000, scoped, tag = 'internal scratch']
  #allocation2 [shape = 'f32[1,1]{1,0:T(1,128)S(6)}', space=smem, size = 0x200, scoped, tag = 'scoped memory for net_forward.1']
  %s0 = inlined_call_operand.vmem [shape: f32[256,16], index: 0, kind: input, shape index: {}]
  %s1 = inlined_call_operand.vmem [shape: f32[30,16], index: 1, kind: input, shape index: {}]
  %s2 = inlined_call_operand.vmem [shape: f32[30,1], index: 2, kind: input, shape index: {}]
  %s3 = inlined_call_operand.vmem [shape: f32[30,1], index: 3, kind: input, shape index: {}]
  %s4 = inlined_call_operand.<no memory space> [shape: f32[1,1], index: 4, kind: input, shape index: {}]
  %s5 = inlined_call_operand.hbm [shape: f32[1,256], index: 5, kind: output, shape index: {}]
  %s6 = sld [smem:[#allocation0]]
  $region30: #{net_forward.1} parent=0
    _
  %s8 = ssub.s32 1, %s6
  %s9 = scalar_select 0, %s8, %s6
  %10 = sst [smem:[#allocation2]] %s4
  $region1: #{net_forward.1} parent=0
    #allocation3 [shape = 'u8[1024]{0}', space=vmem, size = 0x400, scoped, tag = 'output window, operand 0, single buffered']
    #allocation4 [shape = 's32[1]{0}', space=sflag, size = 0x4, scoped, tag = 'scoped memory for net_forward.1']
    %11 = vsyncpa [#allocation4], 0
    // Predicated region
    $region2: #{net_forward.1} parent=1 // pred_check
      _
    $region3: #{net_forward.1} parent=1 // pred_check_branch
      %13 = sbr.rel (0) target = $region5
    $region4: #{net_forward.1} parent=1 // pred_region
      _
    $region5: #{net_forward.1} parent=1 // pred_fallthru
      _
    // Predicated region
    $region6: #{net_forward.1} parent=1 // pred_check
      _
    $region7: #{net_forward.1} parent=1 // pred_check_branch
      %15 = sbr.rel (0) target = $region9
    $region8: #{net_forward.1} parent=1 // pred_region
      _
    $region9: #{net_forward.1} parent=1 // pred_fallthru
      _
    // Predicated region
    $region10: #{net_forward.1} parent=1 // pred_check
      _
    $region11: #{net_forward.1} parent=1 // pred_check_branch
      %17 = sbr.rel (0) target = $region13
    $region12: #{net_forward.1} parent=1 // pred_region
      _
    $region13: #{net_forward.1} parent=1 // pred_fallthru
      _
    // Predicated region
    $region14: #{net_forward.1} parent=1 // pred_check
      _
    $region15: #{net_forward.1} parent=1 // pred_check_branch
      %19 = sbr.rel (0) target = $region17
    $region16: #{net_forward.1} parent=1 // pred_region
      _
    $region17: #{net_forward.1} parent=1 // pred_fallthru
      _
    // Predicated region
    $region18: #{net_forward.1} parent=1 // pred_check
      _
    $region19: #{net_forward.1} parent=1 // pred_check_branch
      %21 = sbr.rel (0) target = $region21
    $region20: #{net_forward.1} parent=1 // pred_region
      _
    $region21: #{net_forward.1} parent=1 // pred_fallthru
      _
    %v22 = vld [vmem:[%s1] sm:$0xff]
    %v23 = vld [vmem:[%s1 + $0x8] sm:$0xff]
    %v24 = vld [vmem:[%s1 + $0x10] sm:$0xff]
    %v25 = vld [vmem:[%s1 + $0x18] sm:$0x3f]
    %v26 = vld [vmem:[%s0] sm:$0xff]
    %v27 = vld [vmem:[%s0 + $0x8] sm:$0xff]
    %v28 = vld [vmem:[%s0 + $0x10] sm:$0xff]
    %v29 = vld [vmem:[%s0 + $0x18] sm:$0xff]
    %v30 = vld [vmem:[%s0 + $0x20] sm:$0xff]
    %v31 = vld [vmem:[%s0 + $0x28] sm:$0xff]
    %v32 = vld [vmem:[%s0 + $0x30] sm:$0xff]
    %v33 = vld [vmem:[%s0 + $0x38] sm:$0xff]
    %v34 = vld [vmem:[%s0 + $0x40] sm:$0xff]
    %v35 = vld [vmem:[%s0 + $0x48] sm:$0xff]
    %v36 = vld [vmem:[%s0 + $0x50] sm:$0xff]
    %v37 = vld [vmem:[%s0 + $0x58] sm:$0xff]
    %v38 = vld [vmem:[%s0 + $0x60] sm:$0xff]
    %v39 = vld [vmem:[%s0 + $0x68] sm:$0xff]
    %v40 = vld [vmem:[%s0 + $0x70] sm:$0xff]
    %v41 = vld [vmem:[%s0 + $0x78] sm:$0xff]
    %v42 = vld [vmem:[%s0 + $0x80] sm:$0xff]
    %v43 = vld [vmem:[%s0 + $0x88] sm:$0xff]
    %v44 = vld [vmem:[%s0 + $0x90] sm:$0xff]
    %v45 = vld [vmem:[%s0 + $0x98] sm:$0xff]
    %v46 = vld [vmem:[%s0 + $0xa0] sm:$0xff]
    %v47 = vld [vmem:[%s0 + $0xa8] sm:$0xff]
    %v48 = vld [vmem:[%s0 + $0xb0] sm:$0xff]
    %v49 = vld [vmem:[%s0 + $0xb8] sm:$0xff]
    %v50 = vld [vmem:[%s0 + $0xc0] sm:$0xff]
    %v51 = vld [vmem:[%s0 + $0xc8] sm:$0xff]
    %v52 = vld [vmem:[%s0 + $0xd0] sm:$0xff]
    %v53 = vld [vmem:[%s0 + $0xd8] sm:$0xff]
    %v54 = vld [vmem:[%s0 + $0xe0] sm:$0xff]
    %v55 = vld [vmem:[%s0 + $0xe8] sm:$0xff]
    %v56 = vld [vmem:[%s0 + $0xf0] sm:$0xff]
    %v57 = vld [vmem:[%s0 + $0xf8] sm:$0xff]
    %v58 = vld [vmem:[%s2] sm:$0xff]
    %v59 = vld [vmem:[%s2 + $0x8] sm:$0xff]
    %v60 = vld [vmem:[%s2 + $0x10] sm:$0xff]
    %v61 = vld [vmem:[%s2 + $0x18] sm:$0x3f]
    %63 = vset.pattern.permute.xlu0 0
    %64 = vperm.xlu0 %63, %v58
    %v65 = vpop.permute.xlu0 %64
    %68 = vset.pattern.permute.xlu0 0
    %69 = vperm.xlu0 %68, %v59
    %v70 = vpop.permute.xlu0 %69
    %73 = vset.pattern.permute.xlu0 0
    %74 = vperm.xlu0 %73, %v60
    %v75 = vpop.permute.xlu0 %74
    %78 = vset.pattern.permute.xlu0 0
    %79 = vperm.xlu0 %78, %v61
    %v80 = vpop.permute.xlu0 %79
    %vm82 = vcmask 130048
    %v84 = vsel %vm82, %v22, 0
    %v87 = vsel %vm82, %v23, 0
    %v90 = vsel %vm82, %v24, 0
    %v93 = vsel %vm82, %v25, 0
    %v96 = vsel %vm82, %v26, 0
    %v99 = vsel %vm82, %v27, 0
    %v102 = vsel %vm82, %v28, 0
    %v105 = vsel %vm82, %v29, 0
    %v108 = vsel %vm82, %v30, 0
    %v111 = vsel %vm82, %v31, 0
    %v114 = vsel %vm82, %v32, 0
    %v117 = vsel %vm82, %v33, 0
    %v120 = vsel %vm82, %v34, 0
    %v123 = vsel %vm82, %v35, 0
    %v126 = vsel %vm82, %v36, 0
    %v129 = vsel %vm82, %v37, 0
    %v132 = vsel %vm82, %v38, 0
    %v135 = vsel %vm82, %v39, 0
    %v138 = vsel %vm82, %v40, 0
    %v141 = vsel %vm82, %v41, 0
    %v144 = vsel %vm82, %v42, 0
    %v147 = vsel %vm82, %v43, 0
    %v150 = vsel %vm82, %v44, 0
    %v153 = vsel %vm82, %v45, 0
    %v156 = vsel %vm82, %v46, 0
    %v159 = vsel %vm82, %v47, 0
    %v162 = vsel %vm82, %v48, 0
    %v165 = vsel %vm82, %v49, 0
    %v168 = vsel %vm82, %v50, 0
    %v171 = vsel %vm82, %v51, 0
    %v174 = vsel %vm82, %v52, 0
    %v177 = vsel %vm82, %v53, 0
    %v180 = vsel %vm82, %v54, 0
    %v183 = vsel %vm82, %v55, 0
    %v186 = vsel %vm82, %v56, 0
    %v189 = vsel %vm82, %v57, 0
    %191 = vmatprep.subr.mxu0 0.0
    %192 = vmatpush1.xpose.msra.mxu0 %v141
    %193 = vmatprep.subr.mxu0 0.0
    %194 = vmatpush1.xpose.msra.mxu0 %v138
    %195 = vmatprep.subr.mxu0 0.0
    %196 = vmatpush1.xpose.msra.mxu0 %v135
    %197 = vmatprep.subr.mxu0 0.0
    %198 = vmatpush1.xpose.msra.mxu0 %v132
    %199 = vmatprep.subr.mxu0 0.0
    %200 = vmatpush1.xpose.msra.mxu0 %v129
    %201 = vmatprep.subr.mxu0 0.0
    %202 = vmatpush1.xpose.msra.mxu0 %v126
    %203 = vmatprep.subr.mxu0 0.0
    %204 = vmatpush1.xpose.msra.mxu0 %v123
    %205 = vmatprep.subr.mxu0 0.0
    %206 = vmatpush1.xpose.msra.mxu0 %v120
    %207 = vmatprep.subr.mxu0 0.0
    %208 = vmatpush1.xpose.msra.mxu0 %v117
    %209 = vmatprep.subr.mxu0 0.0
    %210 = vmatpush1.xpose.msra.mxu0 %v114
    %211 = vmatprep.subr.mxu0 0.0
    %212 = vmatpush1.xpose.msra.mxu0 %v111
    %213 = vmatprep.subr.mxu0 0.0
    %214 = vmatpush1.xpose.msra.mxu0 %v108
    %215 = vmatprep.subr.mxu0 0.0
    %216 = vmatpush1.xpose.msra.mxu0 %v105
    %217 = vmatprep.subr.mxu0 0.0
    %218 = vmatpush1.xpose.msra.mxu0 %v102
    %219 = vmatprep.subr.mxu0 0.0
    %220 = vmatpush1.xpose.msra.mxu0 %v99
    %221 = vmatprep.subr.mxu0 0.0
    %222 = vmatpush1.xpose.msra.mxu0 %v96
    %223 = vmatprep.subr.mxu0 0.0
    %224 = vmatpush2.xpose.msra.mxu0 %v189
    %225 = vmatprep.subr.mxu0 0.0
    %226 = vmatpush2.xpose.msra.mxu0 %v186
    %227 = vmatprep.subr.mxu0 0.0
    %228 = vmatpush2.xpose.msra.mxu0 %v183
    %229 = vmatprep.subr.mxu0 0.0
    %230 = vmatpush2.xpose.msra.mxu0 %v180
    %231 = vmatprep.subr.mxu0 0.0
    %232 = vmatpush2.xpose.msra.mxu0 %v177
    %233 = vmatprep.subr.mxu0 0.0
    %234 = vmatpush2.xpose.msra.mxu0 %v174
    %235 = vmatprep.subr.mxu0 0.0
    %236 = vmatpush2.xpose.msra.mxu0 %v171
    %237 = vmatprep.subr.mxu0 0.0
    %238 = vmatpush2.xpose.msra.mxu0 %v168
    %239 = vmatprep.subr.mxu0 0.0
    %240 = vmatpush2.xpose.msra.mxu0 %v165
    %241 = vmatprep.subr.mxu0 0.0
    %242 = vmatpush2.xpose.msra.mxu0 %v162
    %243 = vmatprep.subr.mxu0 0.0
    %244 = vmatpush2.xpose.msra.mxu0 %v159
    %245 = vmatprep.subr.mxu0 0.0
    %246 = vmatpush2.xpose.msra.mxu0 %v156
    %247 = vmatprep.subr.mxu0 0.0
    %248 = vmatpush2.xpose.msra.mxu0 %v153
    %249 = vmatprep.subr.mxu0 0.0
    %250 = vmatpush2.xpose.msra.mxu0 %v150
    %251 = vmatprep.subr.mxu0 0.0
    %252 = vmatpush2.xpose.msra.mxu0 %v147
    %253 = vmatprep.subr.mxu0 0.0
    %254 = vmatpush2.xpose.msra.mxu0 %v144
    %255 = vmatprep.mubr.f32.mxu0 0.0
    %256 = vmatmul.mubr.f32.gmra.mxu0 %v84
    %v257 = vpop.f32.mrf.mxu0
    %v258 = vadd.f32 %v65, %v257
    %v259 = vpop.f32.mrf.mxu0
    %v260 = vadd.f32 %v65, %v259
    %261 = vmatprep.mubr.f32.mxu0 0.0
    %262 = vmatmul.mubr.f32.gmra.mxu0 %v87
    %v263 = vpop.f32.mrf.mxu0
    %v264 = vadd.f32 %v70, %v263
    %v265 = vpop.f32.mrf.mxu0
    %v266 = vadd.f32 %v70, %v265
    %267 = vmatprep.mubr.f32.mxu0 0.0
    %268 = vmatmul.mubr.f32.gmra.mxu0 %v90
    %v269 = vpop.f32.mrf.mxu0
    %v270 = vadd.f32 %v75, %v269
    %v271 = vpop.f32.mrf.mxu0
    %v272 = vadd.f32 %v75, %v271
    %273 = vmatprep.mubr.f32.mxu0 0.0
    %274 = vmatmul.mubr.f32.gmra.mxu0 %v93
    %v275 = vpop.f32.mrf.mxu0
    %v276 = vadd.f32 %v80, %v275
    %v277 = vpop.f32.mrf.mxu0
    %v278 = vadd.f32 %v80, %v277
    %279 = vdwg.mxu0
    %v280 = vmul.f32 %v258, 0.5
    %v281 = vmul.f32 %v260, 0.5
    %v282 = vmul.f32 %v264, 0.5
    %v283 = vmul.f32 %v266, 0.5
    %v284 = vmul.f32 %v270, 0.5
    %v285 = vmul.f32 %v272, 0.5
    %v286 = vmul.f32 %v276, 0.5
    %v287 = vmul.f32 %v278, 0.5
    %v288 = vtanh.pop %v280
    %v289 = vtanh.pop %v281
    %v290 = vtanh.pop %v282
    %v291 = vtanh.pop %v283
    %v292 = vtanh.pop %v284
    %v293 = vtanh.pop %v285
    %v294 = vtanh.pop %v286
    %v295 = vtanh.pop %v287
    %v296 = vmul.f32 %v288, 0.5
    %v297 = vmul.f32 %v289, 0.5
    %v298 = vmul.f32 %v290, 0.5
    %v299 = vmul.f32 %v291, 0.5
    %v300 = vmul.f32 %v292, 0.5
    %v301 = vmul.f32 %v293, 0.5
    %v302 = vmul.f32 %v294, 0.5
    %v303 = vmul.f32 %v295, 0.5
    %v304 = vadd.f32 %v296, 0.5
    %v305 = vadd.f32 %v297, 0.5
    %v306 = vadd.f32 %v298, 0.5
    %v307 = vadd.f32 %v299, 0.5
    %v308 = vadd.f32 %v300, 0.5
    %v309 = vadd.f32 %v301, 0.5
    %v310 = vadd.f32 %v302, 0.5
    %v311 = vadd.f32 %v303, 0.5
    %v312 = vld [vmem:[%s3] sm:$0xff]
    %v313 = vld [vmem:[%s3 + $0x8] sm:$0xff]
    %v314 = vld [vmem:[%s3 + $0x10] sm:$0xff]
    %v315 = vld [vmem:[%s3 + $0x18] sm:$0x3f]
    %317 = vset.pattern.permute.xlu0 0
    %318 = vperm.xlu0 %317, %v312
    %v319 = vpop.permute.xlu0 %318
    %322 = vset.pattern.permute.xlu0 0
    %323 = vperm.xlu0 %322, %v313
    %v324 = vpop.permute.xlu0 %323
    %327 = vset.pattern.permute.xlu0 0
    %328 = vperm.xlu0 %327, %v314
    %v329 = vpop.permute.xlu0 %328
    %332 = vset.pattern.permute.xlu0 0
    %333 = vperm.xlu0 %332, %v315
    %v334 = vpop.permute.xlu0 %333
    %v336 = vmul.f32 %v304, %v319
    %v337 = vmul.f32 %v305, %v319
    %v338 = vmul.f32 %v306, %v324
    %v339 = vmul.f32 %v307, %v324
    %v340 = vmul.f32 %v308, %v329
    %v341 = vmul.f32 %v309, %v329
    %v342 = vmul.f32 %v310, %v334
    %v343 = vmul.f32 %v311, %v334
    %v344 = vadd.f32 %v336, %v338
    %v345 = vadd.f32 %v344, %v340
    %vm346 = vcmask 1045504
    %v347 = vsel %vm346, %v342, 0.0
    %v348 = vadd.f32 %v345, %v347
    %v349 = vrot.slane %v348, 4
    %v350 = vadd.f32 %v348, %v349
    %v351 = vrot.slane %v350, 2
    %v352 = vadd.f32 %v350, %v351
    %v353 = vrot.slane %v352, 1
    %v354 = vadd.f32 %v352, %v353
    %v355 = vadd.f32 %v337, %v339
    %v356 = vadd.f32 %v355, %v341
    %v357 = vsel %vm346, %v343, 0.0
    %v358 = vadd.f32 %v356, %v357
    %v359 = vrot.slane %v358, 4
    %v360 = vadd.f32 %v358, %v359
    %v361 = vrot.slane %v360, 2
    %v362 = vadd.f32 %v360, %v361
    %v363 = vrot.slane %v362, 1
    %v364 = vadd.f32 %v362, %v363
    %s365 = sld [smem:[#allocation2]]
    %v366 = vstv %s365
    %v367 = vadd.f32 %v354, %v366
    %v368 = vadd.f32 %v364, %v366
    %v369 = vmul.f32 %v367, 0.5
    %v370 = vmul.f32 %v368, 0.5
    %v371 = vtanh.pop %v369
    %v372 = vtanh.pop %v370
    %v373 = vmul.f32 %v371, 0.5
    %v374 = vmul.f32 %v372, 0.5
    %v375 = vadd.f32 %v373, 0.5
    %v376 = vadd.f32 %v374, 0.5
    %v379 = vcombine.low %v375, %v376
    %v381 = vunpack.c.l.s4 1966171168
    %v382 = vunpack.c.0.s8 %v381
    %v383 = vlaneseq
    %v384 = vshrl.u32 %v383, 7
    %v385 = vsub.s32 %v382, %v384
    %v386 = vrot.slane %v379, %v385
    %v388 = vunpack.c.l.s4 1966171168
    %v389 = vunpack.c.0.s8 %v388
    %v390 = vlaneseq
    %v391 = vshrl.u32 %v390, 7
    %v392 = vsub.s32 %v389, %v391
    %v393 = vrot.slane %v386, %v392
    %v395 = vlaneseq
    %vm396 = vcmp.ge.s32.totalorder %v395, 0
    %vm397 = vcmp.lt.s32.totalorder %v395, 256
    %vm398 = vmand %vm396, %vm397
    %399 = vst.msk [vmem:[#allocation3] sm:$0x3] %vm398, %v393
    // Predicated region
    $region22: #{net_forward.1} parent=1 // pred_check
      _
    $region23: #{net_forward.1} parent=1 // pred_check_branch
      %401 = sbr.rel (0) target = $region25
    $region24: #{net_forward.1} parent=1 // pred_region
      %s403 = ssub.s32 32, 32
      %404 = vsyncadd [#allocation4], %s403
      %s406 = sshll.u32 [#allocation3], 4
      %s407 = int_to_ptr.vmem [resolvable:$true] %s406
      %409 = dma.vmem_to_hbm [thread:$0]  %s407, 32, %s5, [#allocation4]
    $region25: #{net_forward.1} parent=1 // pred_fallthru
      _
    // Predicated region
    $region26: #{net_forward.1} parent=1 // pred_check
      _
    $region27: #{net_forward.1} parent=1 // pred_check_branch
      %411 = sbr.rel (0) target = $region29
    $region28: #{net_forward.1} parent=1 // pred_region
      %412 = dma.done [#allocation4], 32
    $region29: #{net_forward.1} parent=1 // pred_fallthru
      _
    %413 = vsyncpa [#allocation4], 1

</llo_original>
